<compile_context>
chip_gen: v7x
topology: tpu7x:2x2x1
jax: 0.10.0
libtpu: 0.0.40
codegen_flags: <defaults>
</compile_context>

<pallas_src>
import jax
import jax.numpy as jnp
from jax.experimental import pallas as pl
from jax.experimental.pallas import tpu as pltpu


# Lane-dense last-dim candidates (multiples of 128), tried largest-first.
_LANE_CANDIDATES = (8192, 4096, 2048, 1024, 512, 256, 128)


def _tpu_config():
    """Per-generation (target_block_bytes, vmem_limit_bytes or None)."""
    try:
        kind = jax.devices()[0].device_kind.lower()
    except Exception:  # pragma: no cover - defensive; assume conservative cfg
        kind = ""
    if "v7" in kind or "7x" in kind:
        # ~3.2 TB/s HBM: amortize the ~0.35 us/step overhead with 8 MiB blocks.
        # 2 arrays x 2 buffers x 8 MiB = 32 MiB -> raise scoped VMEM limit.
        return 8 * 1024 * 1024, 48 << 20
    if "v6" in kind:
        # 2 x 2 x 4 MiB = 16 MiB, comfortably under the 32 MiB scoped default.
        return 4 * 1024 * 1024, None
    # v5e (16 MiB default scoped VMEM) and anything unknown: stay conservative.
    return 2 * 1024 * 1024, None


def _neg_kernel(x_ref, o_ref):
    # Elementwise negation on the current VMEM tile (VPU).
    o_ref[...] = -x_ref[...]


def _sublane_packing(itemsize: int) -> int:
    # 8 rows for 32-bit, 16 for bf16/f16, 32 for int8/fp8.
    return 8 * max(1, 4 // itemsize)


def _round_up(v: int, m: int) -> int:
    return ((v + m - 1) // m) * m


def _pallas_neg(x2d, block_shape, grid, vmem_limit, donate):
    rows, cols = x2d.shape
    itemsize = x2d.dtype.itemsize
    bytes_accessed = 2 * rows * cols * itemsize  # one read + one write
    return pl.pallas_call(
        _neg_kernel,
        out_shape=jax.ShapeDtypeStruct((rows, cols), x2d.dtype),
        grid_spec=pltpu.PrefetchScalarGridSpec(
            num_scalar_prefetch=0,
            grid=grid,
            in_specs=[pl.BlockSpec(block_shape, lambda i: (i, 0))]
            if len(grid) == 1 and block_shape[1] == cols
            else [pl.BlockSpec(block_shape, lambda j: (0, j))],
            out_specs=pl.BlockSpec(block_shape, lambda i: (i, 0))
            if len(grid) == 1 and block_shape[1] == cols
            else pl.BlockSpec(block_shape, lambda j: (0, j)),
        ),
        compiler_params=pltpu.CompilerParams(
            dimension_semantics=("parallel",),
            vmem_limit_bytes=vmem_limit,
        ),
        cost_estimate=pl.CostEstimate(
            flops=0,
            transcendentals=0,
            bytes_accessed=bytes_accessed,
        ),
        input_output_aliases={0: 0} if donate else {},
    )(x2d)


def _neg_rowtile(x2d, target_block_bytes, vmem_limit, donate):
    """Negate a 2-D slab whose last dim is already lane-dense (cols % 128 == 0
    or the tensor is tiny).  Tiles the row dimension."""
    rows, cols = x2d.shape
    itemsize = x2d.dtype.itemsize
    packing = _sublane_packing(itemsize)

    desired = max(packing, target_block_bytes // max(1, cols * itemsize))
    desired = max(packing, (desired // packing) * packing)

    total_bytes = rows * cols * itemsize
    if rows <= desired:
        if total_bytes > (1 << 20) and rows >= 2 * packing:
            # Force >= 2 grid steps so v7x's second TensorCore gets work on
            # mid-sized tensors; costs one extra ~0.35 us step on 1-TC chips.
            tm = _round_up(pl.cdiv(rows, 2), packing)
        else:
            # Single block covering the full dims (divisibility rule waived).
            tm = rows
    else:
        tm = desired

    grid = (pl.cdiv(rows, tm),)
    return _pallas_neg(x2d, (tm, cols), grid, vmem_limit, donate)


def _neg_coltile(x2d, target_block_bytes, vmem_limit, donate):
    """Negate a 2-D slab whose last dim is NOT a multiple of 128 by tiling the
    last dim with a 128-multiple block; Pallas masks the trailing partial
    block, so this stays at 1 read + 1 write (no pad/slice copies)."""
    rows, cols = x2d.shape
    itemsize = x2d.dtype.itemsize

    # Account for sublane padding (rows < 8 pads to 8 in VMEM) when sizing.
    padded_rows = _round_up(rows, 8)
    tn = max(128, (target_block_bytes // max(1, padded_rows * itemsize)) // 128 * 128)
    if cols <= tn:
        # Single block equal to the full array dims (divisibility waived).
        tn = cols
    grid = (pl.cdiv(cols, tn),)
    return _pallas_neg(x2d, (rows, tn), grid, vmem_limit, donate)


def baseline_model_forward(x: dict, donate: bool = False) -> jax.Array:
    """JAX/Pallas equivalent of BaselineModel.forward: returns -x['mbmp'].

    Set donate=True only if the caller no longer needs x['mbmp'] (the output
    then aliases the input buffer)."""
    mbmp = x["mbmp"]
    orig_shape = mbmp.shape
    total = mbmp.size

    if total == 0:
        return -mbmp  # degenerate empty tensor

    flat = mbmp.reshape(-1)
    block_bytes, vmem_limit = _tpu_config()

    # Preferred path: factor the flat size into (rows, C) with a lane-dense C
    # (large multiple of 128) dividing total exactly -> no padding, no copies.
    chosen = None
    for c in _LANE_CANDIDATES:          # prefer sublane-dense (>= 8 rows)
        if total % c == 0 and total // c >= 8:
            chosen = c
            break
    if chosen is None:
        for c in _LANE_CANDIDATES:      # tiny tensors: any 128-multiple works
            if total % c == 0:
                chosen = c
                break

    if chosen is not None:
        out2d = _neg_rowtile(
            flat.reshape(total // chosen, chosen), block_bytes, vmem_limit, donate
        )
        return out2d.reshape(orig_shape)

    # Not a multiple of 128: masked column tiling of the flat tensor.
    rows = 8 if total % 8 == 0 else 1
    out2d = _neg_coltile(
        flat.reshape(rows, total // rows), block_bytes, vmem_limit, donate
    )
    return out2d.reshape(orig_shape)


if __name__ == "__main__":
    # BaselineModel has no trainable parameters used in forward
    # (classification_head is None), so there are no weights to initialize.
    key = jax.random.PRNGKey(0)

    # Small NCHW input consistent with the module's dict-based forward.
    mbmp = jax.random.normal(key, (2, 4, 16, 16), dtype=jnp.float32)
    x = {"mbmp": mbmp}
    out = jax.block_until_ready(baseline_model_forward(x))
    ref = -mbmp
    assert out.shape == ref.shape and out.dtype == ref.dtype
    assert bool(jnp.allclose(out, ref)), "mismatch vs reference -x['mbmp']"

    # Exercise the non-128-multiple (masked column-tile) path as well.
    key2 = jax.random.PRNGKey(1)
    odd = jax.random.normal(key2, (3, 5, 7), dtype=jnp.float32)
    out_odd = jax.block_until_ready(baseline_model_forward({"mbmp": odd}))
    assert out_odd.shape == odd.shape and out_odd.dtype == odd.dtype
    assert bool(jnp.allclose(out_odd, -odd)), "mismatch on odd-sized tensor"

    print("KERNEL_OK")
</pallas_src>

<mosaic_0001>
module attributes {stable_mosaic.version = 11 : i64} {
  func.func @_neg_kernel(%arg0: i32, %arg1: memref<8x256xf32, #tpu.memory_space<vmem>>, %arg2: memref<8x256xf32, #tpu.memory_space<vmem>>) attributes {dimension_semantics = [#tpu.dimension_semantics<parallel>], iteration_bounds = array<i64: 1>, scalar_prefetch = 0 : i64, scratch_operands = 0 : i64, tpu.core_type = #tpu.core_type<tc>, window_params = [{transform_indices = @transform_0, window_bounds = array<i64: 8, 256>}, {transform_indices = @transform_1, window_bounds = array<i64: 8, 256>}]} {
    %c0 = arith.constant 0 : index
    %c0_0 = arith.constant 0 : index
    %0 = vector.load %arg1[%c0, %c0_0] : memref<8x256xf32, #tpu.memory_space<vmem>>, vector<8x256xf32>
    %cst = arith.constant 0.000000e+00 : f32
    %1 = vector.broadcast %cst : f32 to vector<8x256xf32>
    %2 = arith.subf %1, %0 : vector<8x256xf32>
    %c0_1 = arith.constant 0 : index
    %c0_2 = arith.constant 0 : index
    %3 = vector.load %arg2[%c0_1, %c0_2] : memref<8x256xf32, #tpu.memory_space<vmem>>, vector<8x256xf32>
    tpu.vector_store %arg2[%c0_1, %c0_2], %2 {strides = array<i32>} : memref<8x256xf32, #tpu.memory_space<vmem>>, vector<8x256xf32>,
    return
  }
  func.func @transform_0(%arg0: i32) -> (i32, i32) {
    %c0_i32 = arith.constant 0 : i32
    %c0_i32_0 = arith.constant 0 : i32
    return %arg0, %c0_i32 : i32, i32
  }
  func.func @transform_1(%arg0: i32) -> (i32, i32) {
    %c0_i32 = arith.constant 0 : i32
    %c0_i32_0 = arith.constant 0 : i32
    return %arg0, %c0_i32 : i32, i32
  }
}

</mosaic_0001>

<llo_original>
// kernel: tpu_custom_call.1
$region0: #{tpu_custom_call.1}
  #allocation0 [shape = 'u32[]', space=smem, size = 0x4, offset = 0x4, fixed_abs, tag = 'smem constant byte address 0x4 - core index']
  #allocation1 [shape = 'u32[144,128]{1,0:T(1,128)}', space=vmem, size = 0x12000, scoped, tag = 'internal scratch']
  %s0 = inlined_call_operand.hbm [shape: f32[8,256], index: 0, kind: input, shape index: {}]
  %s1 = inlined_call_operand.hbm [shape: f32[8,256], index: 1, kind: output, shape index: {}]
  %s2 = sld [smem:[#allocation0]]
  $region18: #{tpu_custom_call.1} parent=0
    _
  %s4 = ssub.s32 1, %s2
  %s5 = scalar_select 0, %s4, %s2
  $region1: #{tpu_custom_call.1} parent=0
    #allocation2 [shape = 'u8[8192]{0}', space=vmem, size = 0x2000, scoped, tag = 'input window, operand 0, single buffered']
    #allocation3 [shape = 's32[1]{0}', space=sflag, size = 0x4, scoped, tag = 'scoped memory for tpu_custom_call.1']
    #allocation4 [shape = 's32[1]{0}', space=sflag, size = 0x4, scoped, tag = 'scoped memory for tpu_custom_call.1']
    #allocation5 [shape = 'u8[8192]{0}', space=vmem, size = 0x2000, scoped, tag = 'output window, operand 0, single buffered']
    %6 = vsyncpa [#allocation3], 0
    %7 = vsyncpa [#allocation4], 0
    // Predicated region
    $region2: #{tpu_custom_call.1} parent=1 // pred_check
      _
    $region3: #{tpu_custom_call.1} parent=1 // pred_check_branch
      %9 = sbr.rel (0) target = $region5
    $region4: #{tpu_custom_call.1} parent=1 // pred_region
      %s11 = ssub.s32 256, 256
      %12 = vsyncadd [#allocation3], %s11
      %s14 = sshll.u32 [#allocation2], 4
      %s15 = int_to_ptr.vmem [resolvable:$true] %s14
      %17 = dma.hbm_to_vmem [thread:$0]  %s0, 256, %s15, [#allocation3]
    $region5: #{tpu_custom_call.1} parent=1 // pred_fallthru
      _
    // Predicated region
    $region6: #{tpu_custom_call.1} parent=1 // pred_check
      _
    $region7: #{tpu_custom_call.1} parent=1 // pred_check_branch
      %19 = sbr.rel (0) target = $region9
    $region8: #{tpu_custom_call.1} parent=1 // pred_region
      %20 = dma.done [#allocation3], 256
    $region9: #{tpu_custom_call.1} parent=1 // pred_fallthru
      _
    %v21 = vld [vmem:[#allocation2] sm:$0xff]
    %v22 = vld [vmem:[#allocation2 + $0x8] sm:$0xff]
    %v23 = vsub.f32 0.0, %v21
    %v24 = vsub.f32 0.0, %v22
    %25 = vst [vmem:[#allocation5] sm:$0xff] %v23
    %26 = vst [vmem:[#allocation5 + $0x8] sm:$0xff] %v24
    // Predicated region
    $region10: #{tpu_custom_call.1} parent=1 // pred_check
      _
    $region11: #{tpu_custom_call.1} parent=1 // pred_check_branch
      %28 = sbr.rel (0) target = $region13
    $region12: #{tpu_custom_call.1} parent=1 // pred_region
      %s30 = ssub.s32 256, 256
      %31 = vsyncadd [#allocation4], %s30
      %s33 = sshll.u32 [#allocation5], 4
      %s34 = int_to_ptr.vmem [resolvable:$true] %s33
      %36 = dma.vmem_to_hbm [thread:$0]  %s34, 256, %s1, [#allocation4]
    $region13: #{tpu_custom_call.1} parent=1 // pred_fallthru
      _
    // Predicated region
    $region14: #{tpu_custom_call.1} parent=1 // pred_check
      _
    $region15: #{tpu_custom_call.1} parent=1 // pred_check_branch
      %38 = sbr.rel (0) target = $region17
    $region16: #{tpu_custom_call.1} parent=1 // pred_region
      %39 = dma.done [#allocation4], 256
    $region17: #{tpu_custom_call.1} parent=1 // pred_fallthru
      _
    %40 = vsyncpa [#allocation3], 1
    %41 = vsyncpa [#allocation4], 1

</llo_original>
